<compile_context>
chip_gen: v7x
topology: tpu7x:2x2x1
jax: 0.10.0
libtpu: 0.0.40
codegen_flags: <defaults>
</compile_context>

<pallas_src>
import jax
import jax.numpy as jnp
from jax.experimental import pallas as pl
from jax.experimental.pallas import tpu as pltpu


def mlp_kernel(x_ref, w1_ref, b1_ref, w2_ref, b2_ref, out_ref):
    # linear1 on the MXU: (TB, D) @ (D, H), bf16 operands, f32 accumulation.
    # w1 is already bf16 (cast once in the wrapper; it stays VMEM-resident).
    h = jnp.dot(
        x_ref[...].astype(jnp.bfloat16),
        w1_ref[...],
        preferred_element_type=jnp.float32,
    )
    # bias + ReLU on the VPU (f32 everywhere).
    h = jnp.maximum(h + b1_ref[...], 0.0)

    # linear2 (H -> 1): VPU multiply + lane reduce (avoids a degenerate
    # (TB,H)@(H,1) MXU matmul and the 1-lane-wide masked-store output path).
    # NOTE: if a bundle dump ever shows the XLU reduce binding at large TB,
    # this can be offloaded to the (idle) MXU instead.
    y = jnp.sum(h * w2_ref[...], axis=-1) + b2_ref[0, 0]          # (TB,)

    # sigmoid: exp on the EUP + approx EUP reciprocal (vrcp).
    y = y[None, :]                                                 # (1, TB) lane-dense
    out_ref[...] = pl.reciprocal(1.0 + jnp.exp(-y), approx=True).astype(out_ref.dtype)


def _round_up(n, m):
    return ((n + m - 1) // m) * m


def mlp_forward(x, w1, b1, w2, b2, *, block_b=4096):
    """x: (B, D); w1: (D, H); b1: (H,)/(1,H); w2: (H,1)/(H,); b2: scalar/(1,)."""
    B, D = x.shape
    H = w1.shape[1]

    w1_bf16 = jnp.asarray(w1, jnp.bfloat16)             # cast once at trace time
    b1 = jnp.asarray(b1, jnp.float32).reshape(1, H)
    w2_row = jnp.asarray(w2, jnp.float32).reshape(1, H)
    b2 = jnp.asarray(b2, jnp.float32).reshape(1, 1)

    # Batch-tile selection:
    #  * TB is always a multiple of 128 -> lane-dense (1, TB) output blocks and
    #    sublane-aligned x tiles.
    #  * Single tile whenever B fits in block_b (minimizes fixed per-step
    #    overhead; optimal on single-TC v5e/v6e).
    #  * For B > block_b aim for an even number of steps so the "parallel"
    #    batch axis can shard across both TensorCores on v7x.
    #  * No jnp.pad of x: the last block may be partial; Pallas clamps the DMA
    #    at the array edge and the OOB rows (garbage) are sliced off below.
    if B <= block_b:
        TB = _round_up(B, 128)
    else:
        G0 = pl.cdiv(B, block_b)
        G0 = G0 + (G0 % 2)                               # even step count (v7x megacore)
        TB = min(block_b, _round_up(pl.cdiv(B, G0), 128))
    G = pl.cdiv(B, TB)
    Bp = G * TB

    out_row = pl.pallas_call(
        mlp_kernel,
        out_shape=jax.ShapeDtypeStruct((1, Bp), jnp.float32),
        grid=(G,),
        in_specs=[
            pl.BlockSpec((TB, D), lambda i: (i, 0)),             # x: tiled over batch
            pl.BlockSpec((D, H), lambda i: (0, 0)),              # w1 (bf16): VMEM-resident
            pl.BlockSpec((1, H), lambda i: (0, 0)),              # b1: VMEM-resident
            pl.BlockSpec((1, H), lambda i: (0, 0)),              # w2 row: VMEM-resident
            pl.BlockSpec(memory_space=pltpu.MemorySpace.SMEM),   # b2 scalar in SMEM
        ],
        out_specs=pl.BlockSpec((1, TB), lambda i: (0, i)),       # lane-dense slab
        compiler_params=pltpu.CompilerParams(
            dimension_semantics=("parallel",),                   # 2 TCs on v7x; no-op v5e/v6e
        ),
    )(x, w1_bf16, b1, w2_row, b2)

    # Wrapper-side layout plumbing back to the PyTorch (B, 1) convention;
    # drops the padded / garbage rows of the last partial block.
    return out_row.reshape(Bp, 1)[:B]


if __name__ == "__main__":
    # Small shapes consistent with the module: input_size=32, hidden_size=32, batch=8.
    batch, input_size, hidden_size = 8, 32, 32

    key = jax.random.PRNGKey(0)
    kx, kw1, kb1, kw2, kb2, kx2 = jax.random.split(key, 6)

    # Deterministic init mimicking PyTorch's U(-1/sqrt(fan_in), 1/sqrt(fan_in)).
    bound1 = 1.0 / jnp.sqrt(input_size)
    bound2 = 1.0 / jnp.sqrt(hidden_size)
    w1 = jax.random.uniform(kw1, (input_size, hidden_size), jnp.float32, -bound1, bound1)
    b1 = jax.random.uniform(kb1, (hidden_size,), jnp.float32, -bound1, bound1)
    w2 = jax.random.uniform(kw2, (hidden_size, 1), jnp.float32, -bound2, bound2)
    b2 = jax.random.uniform(kb2, (1,), jnp.float32, -bound2, bound2)

    x = jax.random.normal(kx, (batch, input_size), jnp.float32)

    def ref_fn(xv):
        return jax.nn.sigmoid(jnp.maximum(xv @ w1 + b1[None, :], 0.0) @ w2 + b2[None, :])

    # Tolerance loosened slightly because the first matmul runs in bf16 and the
    # sigmoid uses the approximate EUP reciprocal.
    # 1) Small batch: single 128-row tile, partial x block (OOB rows sliced off).
    out = mlp_forward(x, w1, b1, w2, b2)
    jax.block_until_ready(out)
    ref = ref_fn(x)
    assert out.shape == (batch, 1)
    assert jnp.allclose(out, ref, atol=2e-2), "mismatch vs reference (small batch)"

    # 2) Larger batch, default block_b: still one (1024-row) tile, no pad pass.
    x_big = jax.random.normal(kx2, (1000, input_size), jnp.float32)
    out_big = mlp_forward(x_big, w1, b1, w2, b2)
    jax.block_until_ready(out_big)
    assert out_big.shape == (1000, 1)
    assert jnp.allclose(out_big, ref_fn(x_big), atol=2e-2), "mismatch vs reference (large batch)"

    # 3) Force the multi-step grid path (even step count + partial last block).
    out_multi = mlp_forward(x_big, w1, b1, w2, b2, block_b=256)
    jax.block_until_ready(out_multi)
    assert out_multi.shape == (1000, 1)
    assert jnp.allclose(out_multi, ref_fn(x_big), atol=2e-2), "mismatch vs reference (multi-step)"

    print("KERNEL_OK")
</pallas_src>

<mosaic_0001>
module attributes {stable_mosaic.version = 11 : i64} {
  func.func @mlp_kernel(%arg0: i32, %arg1: memref<128x32xf32, #tpu.memory_space<vmem>>, %arg2: memref<32x32xbf16, #tpu.memory_space<vmem>>, %arg3: memref<1x32xf32, #tpu.memory_space<vmem>>, %arg4: memref<1x32xf32, #tpu.memory_space<vmem>>, %arg5: memref<1x1xf32, #tpu.memory_space<smem>>, %arg6: memref<1x128xf32, #tpu.memory_space<vmem>>) attributes {dimension_semantics = [#tpu.dimension_semantics<parallel>], iteration_bounds = array<i64: 1>, scalar_prefetch = 0 : i64, scratch_operands = 0 : i64, tpu.core_type = #tpu.core_type<tc>, window_params = [{transform_indices = @transform_0, window_bounds = array<i64: 128, 32>}, {pipeline_mode = #tpu.pipeline_mode<synchronous>, transform_indices = @transform_1, window_bounds = array<i64: 32, 32>}, {pipeline_mode = #tpu.pipeline_mode<synchronous>, transform_indices = @transform_2, window_bounds = array<i64: 1, 32>}, {pipeline_mode = #tpu.pipeline_mode<synchronous>, transform_indices = @transform_3, window_bounds = array<i64: 1, 32>}, {transform_indices = @transform_4, window_bounds = array<i64: 1, 1>}, {transform_indices = @transform_5, window_bounds = array<i64: 1, 128>}]} {
    %c0 = arith.constant 0 : index
    %c0_0 = arith.constant 0 : index
    %0 = vector.load %arg1[%c0, %c0_0] : memref<128x32xf32, #tpu.memory_space<vmem>>, vector<128x32xf32>
    %1 = arith.truncf %0 : vector<128x32xf32> to vector<128x32xbf16>
    %c0_1 = arith.constant 0 : index
    %c0_2 = arith.constant 0 : index
    %2 = vector.load %arg2[%c0_1, %c0_2] : memref<32x32xbf16, #tpu.memory_space<vmem>>, vector<32x32xbf16>
    %cst = arith.constant dense<0.000000e+00> : vector<128x32xf32>
    %3 = tpu.matmul %1, %2, %cst {dimension_numbers = #tpu.dot_dimension_numbers<[1], [0], [0], [1], [0, 0, 1, 1], [], []>} : vector<128x32xbf16>, vector<32x32xbf16>, vector<128x32xf32> -> vector<128x32xf32>
    %c0_3 = arith.constant 0 : index
    %c0_4 = arith.constant 0 : index
    %4 = vector.load %arg3[%c0_3, %c0_4] : memref<1x32xf32, #tpu.memory_space<vmem>>, vector<1x32xf32>
    %5 = vector.broadcast %4 : vector<1x32xf32> to vector<128x32xf32>
    %6 = arith.addf %3, %5 : vector<128x32xf32>
    %cst_5 = arith.constant 0.000000e+00 : f32
    %7 = vector.broadcast %cst_5 : f32 to vector<128x32xf32>
    %8 = arith.maximumf %6, %7 : vector<128x32xf32>
    %c0_6 = arith.constant 0 : index
    %c0_7 = arith.constant 0 : index
    %9 = vector.load %arg4[%c0_6, %c0_7] : memref<1x32xf32, #tpu.memory_space<vmem>>, vector<1x32xf32>
    %10 = vector.broadcast %9 : vector<1x32xf32> to vector<128x32xf32>
    %11 = arith.mulf %8, %10 : vector<128x32xf32>
    %cst_8 = arith.constant dense<0.000000e+00> : vector<128xf32>
    %12 = vector.multi_reduction <add>, %11, %cst_8 [1] : vector<128x32xf32> to vector<128xf32>
    %c0_9 = arith.constant 0 : index
    %c0_10 = arith.constant 0 : index
    %13 = memref.load %arg5[%c0_9, %c0_10] : memref<1x1xf32, #tpu.memory_space<smem>>
    %14 = vector.broadcast %13 : f32 to vector<128xf32>
    %15 = arith.addf %12, %14 : vector<128xf32>
    %16 = vector.shape_cast %15 : vector<128xf32> to vector<1x128xf32>
    %cst_11 = arith.constant 0.000000e+00 : f32
    %17 = vector.broadcast %cst_11 : f32 to vector<1x128xf32>
    %18 = arith.subf %17, %16 : vector<1x128xf32>
    %19 = math.exp %18 : vector<1x128xf32>
    %cst_12 = arith.constant 1.000000e+00 : f32
    %20 = vector.broadcast %cst_12 : f32 to vector<1x128xf32>
    %21 = arith.addf %20, %19 : vector<1x128xf32>
    %22 = tpu.reciprocal %21 {approx = true} : vector<1x128xf32> -> vector<1x128xf32>
    %c0_13 = arith.constant 0 : index
    %c0_14 = arith.constant 0 : index
    %23 = vector.load %arg6[%c0_13, %c0_14] : memref<1x128xf32, #tpu.memory_space<vmem>>, vector<1x128xf32>
    tpu.vector_store %arg6[%c0_13, %c0_14], %22 {strides = array<i32>} : memref<1x128xf32, #tpu.memory_space<vmem>>, vector<1x128xf32>,
    return
  }
  func.func @transform_0(%arg0: i32) -> (i32, i32) {
    %c0_i32 = arith.constant 0 : i32
    %c0_i32_0 = arith.constant 0 : i32
    return %arg0, %c0_i32 : i32, i32
  }
  func.func @transform_1(%arg0: i32) -> (i32, i32) {
    %c0_i32 = arith.constant 0 : i32
    %c0_i32_0 = arith.constant 0 : i32
    %c0_i32_1 = arith.constant 0 : i32
    return %c0_i32, %c0_i32_0 : i32, i32
  }
  func.func @transform_2(%arg0: i32) -> (i32, i32) {
    %c0_i32 = arith.constant 0 : i32
    %c0_i32_0 = arith.constant 0 : i32
    %c0_i32_1 = arith.constant 0 : i32
    return %c0_i32, %c0_i32_0 : i32, i32
  }
  func.func @transform_3(%arg0: i32) -> (i32, i32) {
    %c0_i32 = arith.constant 0 : i32
    %c0_i32_0 = arith.constant 0 : i32
    %c0_i32_1 = arith.constant 0 : i32
    return %c0_i32, %c0_i32_0 : i32, i32
  }
  func.func @transform_4(%arg0: i32) -> (i32, i32) {
    %c0_i32 = arith.constant 0 : i32
    %c0_i32_0 = arith.constant 0 : i32
    %c0_i32_1 = arith.constant 0 : i32
    return %c0_i32, %c0_i32_0 : i32, i32
  }
  func.func @transform_5(%arg0: i32) -> (i32, i32) {
    %c0_i32 = arith.constant 0 : i32
    %c0_i32_0 = arith.constant 0 : i32
    return %c0_i32, %arg0 : i32, i32
  }
}

</mosaic_0001>

<llo_original>
// kernel: tpu_custom_call.1
$region0: #{tpu_custom_call.1}
  #allocation0 [shape = 'u32[]', space=smem, size = 0x4, offset = 0x4, fixed_abs, tag = 'smem constant byte address 0x4 - core index']
  #allocation1 [shape = 'u32[144,128]{1,0:T(1,128)}', space=vmem, size = 0x12000, scoped, tag = 'internal scratch']
  #allocation2 [shape = 'f32[1,1]{1,0:T(1,128)S(6)}', space=smem, size = 0x200, scoped, tag = 'scoped memory for tpu_custom_call.1']
  %s0 = inlined_call_operand.hbm [shape: f32[8,32], index: 0, kind: input, shape index: {}]
  %s1 = inlined_call_operand.hbm [shape: bf16[32,32], index: 1, kind: input, shape index: {}]
  %s2 = inlined_call_operand.vmem [shape: f32[1,32], index: 2, kind: input, shape index: {}]
  %s3 = inlined_call_operand.vmem [shape: f32[1,32], index: 3, kind: input, shape index: {}]
  %s4 = inlined_call_operand.<no memory space> [shape: f32[1,1], index: 4, kind: input, shape index: {}]
  %s5 = inlined_call_operand.hbm [shape: f32[1,128], index: 5, kind: output, shape index: {}]
  %s6 = sld [smem:[#allocation0]]
  $region38: #{tpu_custom_call.1} parent=0
    _
  %s8 = ssub.s32 1, %s6
  %s9 = scalar_select 0, %s8, %s6
  %10 = sst [smem:[#allocation2]] %s4
  $region1: #{tpu_custom_call.1} parent=0
    #allocation3 [shape = 'u8[65536]{0}', space=vmem, size = 0x10000, scoped, tag = 'input window, operand 0, single buffered']
    #allocation4 [shape = 's32[1]{0}', space=sflag, size = 0x4, scoped, tag = 'scoped memory for tpu_custom_call.1']
    #allocation5 [shape = 's32[1]{0}', space=sflag, size = 0x4, scoped, tag = 'scoped memory for tpu_custom_call.1']
    #allocation6 [shape = 'u8[8192]{0}', space=vmem, size = 0x2000, scoped, tag = 'input window, operand 1, single buffered']
    #allocation7 [shape = 's32[1]{0}', space=sflag, size = 0x4, scoped, tag = 'scoped memory for tpu_custom_call.1']
    #allocation8 [shape = 'u8[512]{0}', space=vmem, size = 0x400, scoped, tag = 'output window, operand 0, single buffered']
    %11 = vsyncpa [#allocation4], 0
    %12 = vsyncpa [#allocation7], 0
    %13 = vsyncpa [#allocation5], 0
    // Predicated region
    $region2: #{tpu_custom_call.1} parent=1 // pred_check
      _
    $region3: #{tpu_custom_call.1} parent=1 // pred_check_branch
      %15 = sbr.rel (0) target = $region5
    $region4: #{tpu_custom_call.1} parent=1 // pred_region
      %s17 = ssub.s32 2048, 128
      %18 = vsyncadd [#allocation4], %s17
      %s19 = sshll.u32 [#allocation3], 4
      %s20 = int_to_ptr.vmem [resolvable:$true] %s19
      %25 = dma.hbm_to_vmem [thread:$0]  %s0, 128, %s20, [#allocation4], 128, 128, 8
    $region5: #{tpu_custom_call.1} parent=1 // pred_fallthru
      _
    // Predicated region
    $region6: #{tpu_custom_call.1} parent=1 // pred_check
      _
    $region7: #{tpu_custom_call.1} parent=1 // pred_check_branch
      %27 = sbr.rel (0) target = $region9
    $region8: #{tpu_custom_call.1} parent=1 // pred_region
      %s29 = ssub.s32 256, 256
      %30 = vsyncadd [#allocation7], %s29
      %s31 = sshll.u32 [#allocation6], 4
      %s32 = int_to_ptr.vmem [resolvable:$true] %s31
      %37 = dma.hbm_to_vmem [thread:$0]  %s1, 256, %s32, [#allocation7], 64, 64, 4
    $region9: #{tpu_custom_call.1} parent=1 // pred_fallthru
      _
    // Predicated region
    $region10: #{tpu_custom_call.1} parent=1 // pred_check
      _
    $region11: #{tpu_custom_call.1} parent=1 // pred_check_branch
      %39 = sbr.rel (0) target = $region13
    $region12: #{tpu_custom_call.1} parent=1 // pred_region
      _
    $region13: #{tpu_custom_call.1} parent=1 // pred_fallthru
      _
    // Predicated region
    $region14: #{tpu_custom_call.1} parent=1 // pred_check
      _
    $region15: #{tpu_custom_call.1} parent=1 // pred_check_branch
      %41 = sbr.rel (0) target = $region17
    $region16: #{tpu_custom_call.1} parent=1 // pred_region
      _
    $region17: #{tpu_custom_call.1} parent=1 // pred_fallthru
      _
    // Predicated region
    $region18: #{tpu_custom_call.1} parent=1 // pred_check
      _
    $region19: #{tpu_custom_call.1} parent=1 // pred_check_branch
      %43 = sbr.rel (0) target = $region21
    $region20: #{tpu_custom_call.1} parent=1 // pred_region
      _
    $region21: #{tpu_custom_call.1} parent=1 // pred_fallthru
      _
    // Predicated region
    $region22: #{tpu_custom_call.1} parent=1 // pred_check
      _
    $region23: #{tpu_custom_call.1} parent=1 // pred_check_branch
      %45 = sbr.rel (0) target = $region25
    $region24: #{tpu_custom_call.1} parent=1 // pred_region
      %46 = dma.done [#allocation4], 2048
    $region25: #{tpu_custom_call.1} parent=1 // pred_fallthru
      _
    // Predicated region
    $region26: #{tpu_custom_call.1} parent=1 // pred_check
      _
    $region27: #{tpu_custom_call.1} parent=1 // pred_check_branch
      %48 = sbr.rel (0) target = $region29
    $region28: #{tpu_custom_call.1} parent=1 // pred_region
      %49 = dma.done [#allocation7], 256
    $region29: #{tpu_custom_call.1} parent=1 // pred_fallthru
      _
    %v51 = vld [vmem:[#allocation3] sm:$0xff]
    %v52 = vld [vmem:[#allocation3 + $0x8] sm:$0xff]
    %v53 = vld [vmem:[#allocation3 + $0x10] sm:$0xff]
    %v54 = vld [vmem:[#allocation3 + $0x18] sm:$0xff]
    %v55 = vld [vmem:[#allocation3 + $0x20] sm:$0xff]
    %v56 = vld [vmem:[#allocation3 + $0x28] sm:$0xff]
    %v57 = vld [vmem:[#allocation3 + $0x30] sm:$0xff]
    %v58 = vld [vmem:[#allocation3 + $0x38] sm:$0xff]
    %v59 = vld [vmem:[#allocation3 + $0x40] sm:$0xff]
    %v60 = vld [vmem:[#allocation3 + $0x48] sm:$0xff]
    %v61 = vld [vmem:[#allocation3 + $0x50] sm:$0xff]
    %v62 = vld [vmem:[#allocation3 + $0x58] sm:$0xff]
    %v63 = vld [vmem:[#allocation3 + $0x60] sm:$0xff]
    %v64 = vld [vmem:[#allocation3 + $0x68] sm:$0xff]
    %v65 = vld [vmem:[#allocation3 + $0x70] sm:$0xff]
    %v66 = vld [vmem:[#allocation3 + $0x78] sm:$0xff]
    %v67 = vpack.c.bf16 %v52, %v51
    %v68 = vpack.c.bf16 %v54, %v53
    %v69 = vpack.c.bf16 %v56, %v55
    %v70 = vpack.c.bf16 %v58, %v57
    %v71 = vpack.c.bf16 %v60, %v59
    %v72 = vpack.c.bf16 %v62, %v61
    %v73 = vpack.c.bf16 %v64, %v63
    %v74 = vpack.c.bf16 %v66, %v65
    %v75 = vld [vmem:[#allocation6] sm:$0xf]
    %v76 = vld [vmem:[#allocation6 + $0x4] sm:$0xf]
    %v77 = vld [vmem:[#allocation6 + $0x8] sm:$0xf]
    %v78 = vld [vmem:[#allocation6 + $0xc] sm:$0xf]
    %v79 = vld [vmem:[%s2] sm:$0x1]
    %v81 = vlaneseq
    %v82 = vshrl.u32 %v81, 7
    %v83 = vsub.s32 0, %v82
    %v84 = vrot.slane %v79, %v83
    %v90 = vunpack.c.l.b16 %v75
    %v91 = vunpack.c.l.b16 %v76
    %v92 = vunpack.c.l.b16 %v77
    %v93 = vunpack.c.l.b16 %v78
    %v94 = vpack.c.b16 %v91, %v90
    %v95 = vpack.c.b16 %v93, %v92
    %vm98 = vcmask 261120
    %v100 = vsel %vm98, %v67, 0
    %v103 = vsel %vm98, %v68, 0
    %v106 = vsel %vm98, %v69, 0
    %v109 = vsel %vm98, %v70, 0
    %v112 = vsel %vm98, %v71, 0
    %v115 = vsel %vm98, %v72, 0
    %v118 = vsel %vm98, %v73, 0
    %v121 = vsel %vm98, %v74, 0
    %123 = vmatprep.subr.bf16.mxu0 0
    %124 = vmatpush1.bf16.msra.mxu0 %v94
    %125 = vmatprep.subr.bf16.mxu0 0
    %126 = vmatpush1.bf16.msra.mxu0 %v95
    %127 = vmatprep.subr.bf16.mxu0 0
    %128 = vmatpush1.bf16.msra.mxu0 0
    %129 = vmatprep.subr.bf16.mxu0 0
    %130 = vmatpush1.bf16.msra.mxu0 0
    %131 = vmatprep.subr.bf16.mxu0 0
    %132 = vmatpush1.bf16.msra.mxu0 0
    %133 = vmatprep.subr.bf16.mxu0 0
    %134 = vmatpush1.bf16.msra.mxu0 0
    %135 = vmatprep.subr.bf16.mxu0 0
    %136 = vmatpush1.bf16.msra.mxu0 0
    %137 = vmatprep.subr.bf16.mxu0 0
    %138 = vmatpush1.bf16.msra.mxu0 0
    %139 = vmatprep.subr.bf16.mxu0 0
    %140 = vmatpush1.bf16.msra.mxu0 0
    %141 = vmatprep.subr.bf16.mxu0 0
    %142 = vmatpush1.bf16.msra.mxu0 0
    %143 = vmatprep.subr.bf16.mxu0 0
    %144 = vmatpush1.bf16.msra.mxu0 0
    %145 = vmatprep.subr.bf16.mxu0 0
    %146 = vmatpush1.bf16.msra.mxu0 0
    %147 = vmatprep.subr.bf16.mxu0 0
    %148 = vmatpush1.bf16.msra.mxu0 0
    %149 = vmatprep.subr.bf16.mxu0 0
    %150 = vmatpush1.bf16.msra.mxu0 0
    %151 = vmatprep.subr.bf16.mxu0 0
    %152 = vmatpush1.bf16.msra.mxu0 0
    %153 = vmatprep.subr.bf16.mxu0 0
    %154 = vmatpush1.bf16.msra.mxu0 0
    %155 = vmatprep.mubr.bf16.mxu0 0
    %156 = vmatmul.mubr.bf16.gmra.mrb[0].mxu0 %v100
    %v157 = vpop.f32.mrb[0].mxu0
    %v158 = vadd.f32 %v84, %v157
    %v159 = vpop.f32.mrb[0].mxu0
    %v160 = vpop.f32.mrb[0].mxu0
    %v161 = vadd.f32 %v84, %v160
    %v162 = vpop.f32.mrb[0].mxu0
    %163 = vmatprep.mubr.bf16.mxu0 0
    %164 = vmatmul.mubr.bf16.gmra.mrb[0].mxu0 %v103
    %v165 = vpop.f32.mrb[0].mxu0
    %v166 = vadd.f32 %v84, %v165
    %v167 = vpop.f32.mrb[0].mxu0
    %v168 = vpop.f32.mrb[0].mxu0
    %v169 = vadd.f32 %v84, %v168
    %v170 = vpop.f32.mrb[0].mxu0
    %171 = vmatprep.mubr.bf16.mxu0 0
    %172 = vmatmul.mubr.bf16.gmra.mrb[0].mxu0 %v106
    %v173 = vpop.f32.mrb[0].mxu0
    %v174 = vadd.f32 %v84, %v173
    %v175 = vpop.f32.mrb[0].mxu0
    %v176 = vpop.f32.mrb[0].mxu0
    %v177 = vadd.f32 %v84, %v176
    %v178 = vpop.f32.mrb[0].mxu0
    %179 = vmatprep.mubr.bf16.mxu0 0
    %180 = vmatmul.mubr.bf16.gmra.mrb[0].mxu0 %v109
    %v181 = vpop.f32.mrb[0].mxu0
    %v182 = vadd.f32 %v84, %v181
    %v183 = vpop.f32.mrb[0].mxu0
    %v184 = vpop.f32.mrb[0].mxu0
    %v185 = vadd.f32 %v84, %v184
    %v186 = vpop.f32.mrb[0].mxu0
    %187 = vmatprep.mubr.bf16.mxu0 0
    %188 = vmatmul.mubr.bf16.gmra.mrb[0].mxu0 %v112
    %v189 = vpop.f32.mrb[0].mxu0
    %v190 = vadd.f32 %v84, %v189
    %v191 = vpop.f32.mrb[0].mxu0
    %v192 = vpop.f32.mrb[0].mxu0
    %v193 = vadd.f32 %v84, %v192
    %v194 = vpop.f32.mrb[0].mxu0
    %195 = vmatprep.mubr.bf16.mxu0 0
    %196 = vmatmul.mubr.bf16.gmra.mrb[0].mxu0 %v115
    %v197 = vpop.f32.mrb[0].mxu0
    %v198 = vadd.f32 %v84, %v197
    %v199 = vpop.f32.mrb[0].mxu0
    %v200 = vpop.f32.mrb[0].mxu0
    %v201 = vadd.f32 %v84, %v200
    %v202 = vpop.f32.mrb[0].mxu0
    %203 = vmatprep.mubr.bf16.mxu0 0
    %204 = vmatmul.mubr.bf16.gmra.mrb[0].mxu0 %v118
    %v205 = vpop.f32.mrb[0].mxu0
    %v206 = vadd.f32 %v84, %v205
    %v207 = vpop.f32.mrb[0].mxu0
    %v208 = vpop.f32.mrb[0].mxu0
    %v209 = vadd.f32 %v84, %v208
    %v210 = vpop.f32.mrb[0].mxu0
    %211 = vmatprep.mubr.bf16.mxu0 0
    %212 = vmatmul.mubr.bf16.gmra.mrb[0].mxu0 %v121
    %v213 = vpop.f32.mrb[0].mxu0
    %v214 = vadd.f32 %v84, %v213
    %v215 = vpop.f32.mrb[0].mxu0
    %v216 = vpop.f32.mrb[0].mxu0
    %v217 = vadd.f32 %v84, %v216
    %v218 = vpop.f32.mrb[0].mxu0
    %219 = vdwg.mxu0
    %v220 = vmax.f32 %v158, 0.0
    %v221 = vmax.f32 %v161, 0.0
    %v222 = vmax.f32 %v166, 0.0
    %v223 = vmax.f32 %v169, 0.0
    %v224 = vmax.f32 %v174, 0.0
    %v225 = vmax.f32 %v177, 0.0
    %v226 = vmax.f32 %v182, 0.0
    %v227 = vmax.f32 %v185, 0.0
    %v228 = vmax.f32 %v190, 0.0
    %v229 = vmax.f32 %v193, 0.0
    %v230 = vmax.f32 %v198, 0.0
    %v231 = vmax.f32 %v201, 0.0
    %v232 = vmax.f32 %v206, 0.0
    %v233 = vmax.f32 %v209, 0.0
    %v234 = vmax.f32 %v214, 0.0
    %v235 = vmax.f32 %v217, 0.0
    %v236 = vld [vmem:[%s3] sm:$0x1]
    %v238 = vlaneseq
    %v239 = vshrl.u32 %v238, 7
    %v240 = vsub.s32 0, %v239
    %v241 = vrot.slane %v236, %v240
    %v243 = vmul.f32 %v220, %v241
    %v244 = vmul.f32 %v221, %v241
    %v245 = vmul.f32 %v222, %v241
    %v246 = vmul.f32 %v223, %v241
    %v247 = vmul.f32 %v224, %v241
    %v248 = vmul.f32 %v225, %v241
    %v249 = vmul.f32 %v226, %v241
    %v250 = vmul.f32 %v227, %v241
    %v251 = vmul.f32 %v228, %v241
    %v252 = vmul.f32 %v229, %v241
    %v253 = vmul.f32 %v230, %v241
    %v254 = vmul.f32 %v231, %v241
    %v255 = vmul.f32 %v232, %v241
    %v256 = vmul.f32 %v233, %v241
    %v257 = vmul.f32 %v234, %v241
    %v258 = vmul.f32 %v235, %v241
    %v259 = vsel %vm98, %v243, 0.0
    %260 = vadd.xlane.f32.xlu0 %v259
    %v261 = vpop.xlane.xlu0 %260
    %v262 = vsel %vm98, %v244, 0.0
    %263 = vadd.xlane.f32.xlu0 %v262
    %v264 = vpop.xlane.xlu0 %263
    %v265 = vsel %vm98, %v245, 0.0
    %266 = vadd.xlane.f32.xlu0 %v265
    %v267 = vpop.xlane.xlu0 %266
    %v268 = vsel %vm98, %v246, 0.0
    %269 = vadd.xlane.f32.xlu0 %v268
    %v270 = vpop.xlane.xlu0 %269
    %v271 = vsel %vm98, %v247, 0.0
    %272 = vadd.xlane.f32.xlu0 %v271
    %v273 = vpop.xlane.xlu0 %272
    %v274 = vsel %vm98, %v248, 0.0
    %275 = vadd.xlane.f32.xlu0 %v274
    %v276 = vpop.xlane.xlu0 %275
    %v277 = vsel %vm98, %v249, 0.0
    %278 = vadd.xlane.f32.xlu0 %v277
    %v279 = vpop.xlane.xlu0 %278
    %v280 = vsel %vm98, %v250, 0.0
    %281 = vadd.xlane.f32.xlu0 %v280
    %v282 = vpop.xlane.xlu0 %281
    %v283 = vsel %vm98, %v251, 0.0
    %284 = vadd.xlane.f32.xlu0 %v283
    %v285 = vpop.xlane.xlu0 %284
    %v286 = vsel %vm98, %v252, 0.0
    %287 = vadd.xlane.f32.xlu0 %v286
    %v288 = vpop.xlane.xlu0 %287
    %v289 = vsel %vm98, %v253, 0.0
    %290 = vadd.xlane.f32.xlu0 %v289
    %v291 = vpop.xlane.xlu0 %290
    %v292 = vsel %vm98, %v254, 0.0
    %293 = vadd.xlane.f32.xlu0 %v292
    %v294 = vpop.xlane.xlu0 %293
    %v295 = vsel %vm98, %v255, 0.0
    %296 = vadd.xlane.f32.xlu0 %v295
    %v297 = vpop.xlane.xlu0 %296
    %v298 = vsel %vm98, %v256, 0.0
    %299 = vadd.xlane.f32.xlu0 %v298
    %v300 = vpop.xlane.xlu0 %299
    %v301 = vsel %vm98, %v257, 0.0
    %302 = vadd.xlane.f32.xlu0 %v301
    %v303 = vpop.xlane.xlu0 %302
    %v304 = vsel %vm98, %v258, 0.0
    %305 = vadd.xlane.f32.xlu0 %v304
    %v306 = vpop.xlane.xlu0 %305
    %s307 = sld [smem:[#allocation2]]
    %v308 = vstv %s307
    %v309 = vadd.f32 %v261, %v308
    %v310 = vadd.f32 %v264, %v308
    %v311 = vadd.f32 %v267, %v308
    %v312 = vadd.f32 %v270, %v308
    %v313 = vadd.f32 %v273, %v308
    %v314 = vadd.f32 %v276, %v308
    %v315 = vadd.f32 %v279, %v308
    %v316 = vadd.f32 %v282, %v308
    %v317 = vadd.f32 %v285, %v308
    %v318 = vadd.f32 %v288, %v308
    %v319 = vadd.f32 %v291, %v308
    %v320 = vadd.f32 %v294, %v308
    %v321 = vadd.f32 %v297, %v308
    %v322 = vadd.f32 %v300, %v308
    %v323 = vadd.f32 %v303, %v308
    %v324 = vadd.f32 %v306, %v308
    %v325 = vsub.f32 0.0, %v309
    %v326 = vsub.f32 0.0, %v310
    %v327 = vsub.f32 0.0, %v311
    %v328 = vsub.f32 0.0, %v312
    %v329 = vsub.f32 0.0, %v313
    %v330 = vsub.f32 0.0, %v314
    %v331 = vsub.f32 0.0, %v315
    %v332 = vsub.f32 0.0, %v316
    %v333 = vsub.f32 0.0, %v317
    %v334 = vsub.f32 0.0, %v318
    %v335 = vsub.f32 0.0, %v319
    %v336 = vsub.f32 0.0, %v320
    %v337 = vsub.f32 0.0, %v321
    %v338 = vsub.f32 0.0, %v322
    %v339 = vsub.f32 0.0, %v323
    %v340 = vsub.f32 0.0, %v324
    %v341 = vmul.f32 %v325, 1.442695
    %v342 = vpow.pop %v341
    %v343 = vmul.f32 %v326, 1.442695
    %v344 = vpow.pop %v343
    %v345 = vmul.f32 %v327, 1.442695
    %v346 = vpow.pop %v345
    %v347 = vmul.f32 %v328, 1.442695
    %v348 = vpow.pop %v347
    %v349 = vmul.f32 %v329, 1.442695
    %v350 = vpow.pop %v349
    %v351 = vmul.f32 %v330, 1.442695
    %v352 = vpow.pop %v351
    %v353 = vmul.f32 %v331, 1.442695
    %v354 = vpow.pop %v353
    %v355 = vmul.f32 %v332, 1.442695
    %v356 = vpow.pop %v355
    %v357 = vmul.f32 %v333, 1.442695
    %v358 = vpow.pop %v357
    %v359 = vmul.f32 %v334, 1.442695
    %v360 = vpow.pop %v359
    %v361 = vmul.f32 %v335, 1.442695
    %v362 = vpow.pop %v361
    %v363 = vmul.f32 %v336, 1.442695
    %v364 = vpow.pop %v363
    %v365 = vmul.f32 %v337, 1.442695
    %v366 = vpow.pop %v365
    %v367 = vmul.f32 %v338, 1.442695
    %v368 = vpow.pop %v367
    %v369 = vmul.f32 %v339, 1.442695
    %v370 = vpow.pop %v369
    %v371 = vmul.f32 %v340, 1.442695
    %v372 = vpow.pop %v371
    %v373 = vadd.f32 %v342, 1.0
    %v374 = vadd.f32 %v344, 1.0
    %v375 = vadd.f32 %v346, 1.0
    %v376 = vadd.f32 %v348, 1.0
    %v377 = vadd.f32 %v350, 1.0
    %v378 = vadd.f32 %v352, 1.0
    %v379 = vadd.f32 %v354, 1.0
    %v380 = vadd.f32 %v356, 1.0
    %v381 = vadd.f32 %v358, 1.0
    %v382 = vadd.f32 %v360, 1.0
    %v383 = vadd.f32 %v362, 1.0
    %v384 = vadd.f32 %v364, 1.0
    %v385 = vadd.f32 %v366, 1.0
    %v386 = vadd.f32 %v368, 1.0
    %v387 = vadd.f32 %v370, 1.0
    %v388 = vadd.f32 %v372, 1.0
    %v389 = vrcp.pop %v373
    %v390 = vrcp.pop %v374
    %v391 = vrcp.pop %v375
    %v392 = vrcp.pop %v376
    %v393 = vrcp.pop %v377
    %v394 = vrcp.pop %v378
    %v395 = vrcp.pop %v379
    %v396 = vrcp.pop %v380
    %v397 = vrcp.pop %v381
    %v398 = vrcp.pop %v382
    %v399 = vrcp.pop %v383
    %v400 = vrcp.pop %v384
    %v401 = vrcp.pop %v385
    %v402 = vrcp.pop %v386
    %v403 = vrcp.pop %v387
    %v404 = vrcp.pop %v388
    %v421 = vlaneseq
    %v422 = vand.u32 %v421, 127
    %v423 = vlaneseq
    %v424 = vshrl.u32 %v423, 7
    %v425 = vsub.s32 %v422, %v424
    %v426 = vrot.slane %v389, %v425
    %v427 = vadd.s32 %v422, 4294967288
    %v428 = vlaneseq
    %v429 = vshrl.u32 %v428, 7
    %v430 = vsub.s32 %v427, %v429
    %v431 = vrot.slane %v390, %v430
    %vm432 = vcmask 130112
    %v433 = vsel %vm432, %v431, %v426
    %v434 = vadd.s32 %v422, 4294967280
    %v435 = vlaneseq
    %v436 = vshrl.u32 %v435, 7
    %v437 = vsub.s32 %v434, %v436
    %v438 = vrot.slane %v391, %v437
    %vm439 = vcmask 195712
    %v440 = vsel %vm439, %v438, %v433
    %v441 = vadd.s32 %v422, 4294967272
    %v442 = vlaneseq
    %v443 = vshrl.u32 %v442, 7
    %v444 = vsub.s32 %v441, %v443
    %v445 = vrot.slane %v392, %v444
    %vm446 = vcmask 261312
    %v447 = vsel %vm446, %v445, %v440
    %v448 = vadd.s32 %v422, 4294967264
    %v449 = vlaneseq
    %v450 = vshrl.u32 %v449, 7
    %v451 = vsub.s32 %v448, %v450
    %v452 = vrot.slane %v393, %v451
    %vm453 = vcmask 326912
    %v454 = vsel %vm453, %v452, %v447
    %v455 = vadd.s32 %v422, 4294967256
    %v456 = vlaneseq
    %v457 = vshrl.u32 %v456, 7
    %v458 = vsub.s32 %v455, %v457
    %v459 = vrot.slane %v394, %v458
    %vm460 = vcmask 392512
    %v461 = vsel %vm460, %v459, %v454
    %v462 = vadd.s32 %v422, 4294967248
    %v463 = vlaneseq
    %v464 = vshrl.u32 %v463, 7
    %v465 = vsub.s32 %v462, %v464
    %v466 = vrot.slane %v395, %v465
    %vm467 = vcmask 458112
    %v468 = vsel %vm467, %v466, %v461
    %v469 = vadd.s32 %v422, 4294967240
    %v470 = vlaneseq
    %v471 = vshrl.u32 %v470, 7
    %v472 = vsub.s32 %v469, %v471
    %v473 = vrot.slane %v396, %v472
    %vm474 = vcmask 523712
    %v475 = vsel %vm474, %v473, %v468
    %v476 = vadd.s32 %v422, 4294967232
    %v477 = vlaneseq
    %v478 = vshrl.u32 %v477, 7
    %v479 = vsub.s32 %v476, %v478
    %v480 = vrot.slane %v397, %v479
    %vm481 = vcmask 589312
    %v482 = vsel %vm481, %v480, %v475
    %v483 = vadd.s32 %v422, 4294967224
    %v484 = vlaneseq
    %v485 = vshrl.u32 %v484, 7
    %v486 = vsub.s32 %v483, %v485
    %v487 = vrot.slane %v398, %v486
    %vm488 = vcmask 654912
    %v489 = vsel %vm488, %v487, %v482
    %v490 = vadd.s32 %v422, 4294967216
    %v491 = vlaneseq
    %v492 = vshrl.u32 %v491, 7
    %v493 = vsub.s32 %v490, %v492
    %v494 = vrot.slane %v399, %v493
    %vm495 = vcmask 720512
    %v496 = vsel %vm495, %v494, %v489
    %v497 = vadd.s32 %v422, 4294967208
    %v498 = vlaneseq
    %v499 = vshrl.u32 %v498, 7
    %v500 = vsub.s32 %v497, %v499
    %v501 = vrot.slane %v400, %v500
    %vm502 = vcmask 786112
    %v503 = vsel %vm502, %v501, %v496
    %v504 = vadd.s32 %v422, 4294967200
    %v505 = vlaneseq
    %v506 = vshrl.u32 %v505, 7
    %v507 = vsub.s32 %v504, %v506
    %v508 = vrot.slane %v401, %v507
    %vm509 = vcmask 851712
    %v510 = vsel %vm509, %v508, %v503
    %v511 = vadd.s32 %v422, 4294967192
    %v512 = vlaneseq
    %v513 = vshrl.u32 %v512, 7
    %v514 = vsub.s32 %v511, %v513
    %v515 = vrot.slane %v402, %v514
    %vm516 = vcmask 917312
    %v517 = vsel %vm516, %v515, %v510
    %v518 = vadd.s32 %v422, 4294967184
    %v519 = vlaneseq
    %v520 = vshrl.u32 %v519, 7
    %v521 = vsub.s32 %v518, %v520
    %v522 = vrot.slane %v403, %v521
    %vm523 = vcmask 982912
    %v524 = vsel %vm523, %v522, %v517
    %v525 = vadd.s32 %v422, 4294967176
    %v526 = vlaneseq
    %v527 = vshrl.u32 %v526, 7
    %v528 = vsub.s32 %v525, %v527
    %v529 = vrot.slane %v404, %v528
    %vm530 = vcmask 1048512
    %v531 = vsel %vm530, %v529, %v524
    %533 = vst [vmem:[#allocation8] sm:$0x1] %v531
    // Predicated region
    $region30: #{tpu_custom_call.1} parent=1 // pred_check
      _
    $region31: #{tpu_custom_call.1} parent=1 // pred_check_branch
      %535 = sbr.rel (0) target = $region33
    $region32: #{tpu_custom_call.1} parent=1 // pred_region
      %s537 = ssub.s32 16, 16
      %538 = vsyncadd [#allocation5], %s537
      %s540 = sshll.u32 [#allocation8], 4
      %s541 = int_to_ptr.vmem [resolvable:$true] %s540
      %543 = dma.vmem_to_hbm [thread:$0]  %s541, 16, %s5, [#allocation5]
    $region33: #{tpu_custom_call.1} parent=1 // pred_fallthru
      _
    // Predicated region
    $region34: #{tpu_custom_call.1} parent=1 // pred_check
      _
    $region35: #{tpu_custom_call.1} parent=1 // pred_check_branch
      %545 = sbr.rel (0) target = $region37
    $region36: #{tpu_custom_call.1} parent=1 // pred_region
      %546 = dma.done [#allocation5], 16
    $region37: #{tpu_custom_call.1} parent=1 // pred_fallthru
      _
    %547 = vsyncpa [#allocation4], 1
    %548 = vsyncpa [#allocation7], 1
    %549 = vsyncpa [#allocation5], 1

</llo_original>
